<compile_context>
chip_gen: v5e
topology: v5e:2x2
jax: 0.10.0
libtpu: 0.0.40
codegen_flags: <defaults>
</compile_context>

<pallas_src>
import functools

import jax
import jax.numpy as jnp
from jax import lax
from jax.experimental import pallas as pl
from jax.experimental.pallas import tpu as pltpu


def lsa_kernel(scale_ref, x_ref, wqkv_ref, wo_ref, bias_ref, o_ref, *,
               compute_dtype):
    """Grid = (batch_tiles,). One batch tile (all heads) per invocation.

    x_ref    : (bt, N, D)        input tokens for this batch tile
    wqkv_ref : (D, 3*H*Dh)       fused qkv projection, columns [q | k | v]
    wo_ref   : (H, Dh, Dp)       per-head output projection, lane-padded to Dp
    bias_ref : (1, Dp)           output projection bias (lane-padded)
    o_ref    : (bt, N, Dp)       output tile (lane-dense), written once
    """
    bt, n, _ = x_ref.shape
    heads, dim_head, dp = wo_ref.shape
    inner = heads * dim_head
    rows = bt * n

    scale = scale_ref[0]                                   # exp(temperature), f32

    # Fused QKV projection for all heads: one wide MXU matmul, f32 accumulate.
    x = x_ref[...].reshape(rows, x_ref.shape[-1]).astype(compute_dtype)
    wqkv = wqkv_ref[...].astype(compute_dtype)
    qkv = jnp.dot(x, wqkv, preferred_element_type=jnp.float32)  # (rows, 3*inner)

    # Diagonal mask (built once, shared by all heads).
    row_ids = lax.broadcasted_iota(jnp.int32, (bt, n, n), 1)
    col_ids = lax.broadcasted_iota(jnp.int32, (bt, n, n), 2)
    diag = row_ids == col_ids
    mask_value = -jnp.finfo(jnp.float32).max

    acc = jnp.zeros((rows, dp), jnp.float32)
    for h in range(heads):                                 # unrolled at trace time
        q = qkv[:, h * dim_head:(h + 1) * dim_head]
        k = qkv[:, inner + h * dim_head:inner + (h + 1) * dim_head]
        v = qkv[:, 2 * inner + h * dim_head:2 * inner + (h + 1) * dim_head]
        q = q.reshape(bt, n, dim_head).astype(compute_dtype)
        k = k.reshape(bt, n, dim_head).astype(compute_dtype)
        v = v.reshape(bt, n, dim_head).astype(compute_dtype)

        # q @ k^T via contraction on the last dims (no transpose materialized).
        dots = jnp.einsum('bnd,bmd->bnm', q, k,
                          preferred_element_type=jnp.float32) * scale
        dots = jnp.where(diag, mask_value, dots)

        # Numerically stable softmax in f32; reciprocal on the EUP.
        dots = dots - jnp.max(dots, axis=-1, keepdims=True)
        e = jnp.exp(dots)
        attn = e * pl.reciprocal(jnp.sum(e, axis=-1, keepdims=True), approx=True)

        out_h = jnp.einsum('bnm,bmd->bnd', attn.astype(compute_dtype), v,
                           preferred_element_type=jnp.float32)   # (bt, n, Dh)
        acc = acc + jnp.dot(out_h.reshape(rows, dim_head).astype(compute_dtype),
                            wo_ref[h].astype(compute_dtype),
                            preferred_element_type=jnp.float32)  # (rows, Dp)

    out = acc + bias_ref[...].astype(jnp.float32)          # (rows, Dp) + (1, Dp)
    o_ref[...] = out.reshape(bt, n, dp).astype(o_ref.dtype)


def prepare_lsa_params(w_qkv, w_out, b_out, temperature, *, heads, dim_head,
                       lane_multiple=128, param_dtype=jnp.float32):
    """One-time parameter layout prep (hoisted out of the forward pass)."""
    inner = heads * dim_head
    d = w_out.shape[0]
    dp = ((d + lane_multiple - 1) // lane_multiple) * lane_multiple

    # torch Linear stores (out_features, in_features); y = x @ W.T.
    wqkv = jnp.asarray(w_qkv).T                              # (D, 3*inner)
    wo = jnp.asarray(w_out).T.reshape(heads, dim_head, d)    # (H, Dh, D)
    wo = jnp.pad(wo, ((0, 0), (0, 0), (0, dp - d)))          # lane-dense output
    bias = jnp.pad(jnp.asarray(b_out), (0, dp - d)).reshape(1, dp)
    scale = jnp.exp(jnp.asarray(temperature)).reshape(1).astype(jnp.float32)
    return {
        "wqkv": wqkv.astype(param_dtype),
        "wo": wo.astype(param_dtype),
        "bias": bias.astype(jnp.float32),     # bias always added in f32
        "scale": scale,
    }


def lsa_forward(x, params, *, batch_tile=None, compute_dtype=jnp.float32):
    """x: (B, N, D) -> (B, N, D). params from prepare_lsa_params()."""
    B, N, D = x.shape
    wqkv, wo, bias, scale = (params["wqkv"], params["wo"], params["bias"],
                             params["scale"])
    heads, dim_head, dp = wo.shape
    inner = heads * dim_head
    assert wqkv.shape == (D, 3 * inner)

    # Batch-tile so each MXU matmul sees ~>=128 rows when B allows it.
    if batch_tile is None:
        batch_tile = max(1, min(B, -(-128 // N)))
    bt = batch_tile
    num_tiles = -(-B // bt)
    b_pad = num_tiles * bt
    if b_pad != B:
        x = jnp.pad(x, ((0, b_pad - B), (0, 0), (0, 0)))

    kernel = functools.partial(lsa_kernel, compute_dtype=compute_dtype)

    out = pl.pallas_call(
        kernel,
        out_shape=jax.ShapeDtypeStruct((b_pad, N, dp), jnp.float32),
        grid_spec=pltpu.PrefetchScalarGridSpec(
            num_scalar_prefetch=0,
            grid=(num_tiles,),
            in_specs=[
                pl.BlockSpec(memory_space=pltpu.SMEM),                    # scale
                pl.BlockSpec((bt, N, D), lambda i: (i, 0, 0)),            # x
                pl.BlockSpec((D, 3 * inner), lambda i: (0, 0)),           # wqkv
                pl.BlockSpec((heads, dim_head, dp), lambda i: (0, 0, 0)),  # wo
                pl.BlockSpec((1, dp), lambda i: (0, 0)),                  # bias
            ],
            out_specs=pl.BlockSpec((bt, N, dp), lambda i: (i, 0, 0)),
        ),
        compiler_params=pltpu.CompilerParams(
            dimension_semantics=("parallel",)),
    )(scale, x, wqkv, wo, bias)

    return out[:B, :, :D]


def lsa_reference(x, w_qkv, w_out, b_out, temperature, *, heads, dim_head):
    """Pure-JAX reference mirroring the PyTorch LSA forward."""
    B, N, D = x.shape
    inner = heads * dim_head
    qkv = x @ w_qkv.T                                        # (B, N, 3*inner)
    q, k, v = jnp.split(qkv, 3, axis=-1)

    def split_heads(t):
        return t.reshape(B, N, heads, dim_head).transpose(0, 2, 1, 3)

    q, k, v = map(split_heads, (q, k, v))
    dots = jnp.einsum('bhnd,bhmd->bhnm', q, k) * jnp.exp(temperature)
    eye = jnp.eye(N, dtype=bool)
    dots = jnp.where(eye, -jnp.finfo(dots.dtype).max, dots)
    attn = jax.nn.softmax(dots, axis=-1)
    out = jnp.einsum('bhnm,bhmd->bhnd', attn, v)
    out = out.transpose(0, 2, 1, 3).reshape(B, N, inner)
    return out @ w_out.T + b_out


if __name__ == "__main__":
    # small shapes consistent with the module's forward
    B, N, D = 2, 8, 32
    heads, dim_head = 3, 16
    inner = heads * dim_head

    key = jax.random.PRNGKey(0)
    kx, kqkv, kwo, kbo = jax.random.split(key, 4)

    x = jax.random.normal(kx, (B, N, D), dtype=jnp.float32)
    # deterministic parameter init (synthetic; no checkpoint)
    w_qkv = jax.random.normal(kqkv, (3 * inner, D), dtype=jnp.float32) * 0.05
    w_out = jax.random.normal(kwo, (D, inner), dtype=jnp.float32) * 0.05
    b_out = jax.random.normal(kbo, (D,), dtype=jnp.float32) * 0.05
    temperature = jnp.log(jnp.asarray(dim_head ** -0.5, dtype=jnp.float32))
    # TODO(synk): nn.Dropout(p=0.0) is identity in eval / zero-prob; omitted.

    ref = lsa_reference(x, w_qkv, w_out, b_out, temperature,
                        heads=heads, dim_head=dim_head)

    # f32 path (v5e-friendly; also the correctness baseline).
    params_f32 = prepare_lsa_params(w_qkv, w_out, b_out, temperature,
                                    heads=heads, dim_head=dim_head)
    fwd_f32 = jax.jit(functools.partial(lsa_forward, compute_dtype=jnp.float32))
    out = jax.block_until_ready(fwd_f32(x, params_f32))
    assert out.shape == (B, N, D)
    assert jnp.allclose(out, ref, atol=2e-3, rtol=2e-3), "f32 kernel mismatch"

    # bf16 MXU-input path (v6e/v7x recommendation): bf16 operands, f32 accumulate.
    params_bf16 = prepare_lsa_params(w_qkv, w_out, b_out, temperature,
                                     heads=heads, dim_head=dim_head,
                                     param_dtype=jnp.bfloat16)
    fwd_bf16 = jax.jit(functools.partial(lsa_forward, compute_dtype=jnp.bfloat16))
    out_bf16 = jax.block_until_ready(fwd_bf16(x.astype(jnp.bfloat16), params_bf16))
    assert out_bf16.shape == (B, N, D)
    assert jnp.allclose(out_bf16, ref, atol=5e-2, rtol=5e-2), "bf16 kernel mismatch"

    print("KERNEL_OK")
</pallas_src>

<mosaic_0001>
module attributes {stable_mosaic.version = 11 : i64} {
  func.func @lsa_kernel(%arg0: i32, %arg1: memref<1xf32, #tpu.memory_space<smem>>, %arg2: memref<2x8x32xf32, #tpu.memory_space<vmem>>, %arg3: memref<32x144xf32, #tpu.memory_space<vmem>>, %arg4: memref<3x16x128xf32, #tpu.memory_space<vmem>>, %arg5: memref<1x128xf32, #tpu.memory_space<vmem>>, %arg6: memref<2x8x128xf32, #tpu.memory_space<vmem>>) attributes {dimension_semantics = [#tpu.dimension_semantics<parallel>], iteration_bounds = array<i64: 1>, scalar_prefetch = 0 : i64, scratch_operands = 0 : i64, tpu.core_type = #tpu.core_type<tc>, window_params = [{transform_indices = @transform_0, window_bounds = array<i64: 1>}, {transform_indices = @transform_1, window_bounds = array<i64: 2, 8, 32>}, {pipeline_mode = #tpu.pipeline_mode<synchronous>, transform_indices = @transform_2, window_bounds = array<i64: 32, 144>}, {pipeline_mode = #tpu.pipeline_mode<synchronous>, transform_indices = @transform_3, window_bounds = array<i64: 3, 16, 128>}, {pipeline_mode = #tpu.pipeline_mode<synchronous>, transform_indices = @transform_4, window_bounds = array<i64: 1, 128>}, {transform_indices = @transform_5, window_bounds = array<i64: 2, 8, 128>}]} {
    %c0 = arith.constant 0 : index
    %0 = memref.load %arg1[%c0] : memref<1xf32, #tpu.memory_space<smem>>
    %c0_0 = arith.constant 0 : index
    %c0_1 = arith.constant 0 : index
    %c0_2 = arith.constant 0 : index
    %1 = vector.load %arg2[%c0_0, %c0_1, %c0_2] : memref<2x8x32xf32, #tpu.memory_space<vmem>>, vector<2x8x32xf32>
    %2 = vector.shape_cast %1 : vector<2x8x32xf32> to vector<16x32xf32>
    %c0_3 = arith.constant 0 : index
    %c0_4 = arith.constant 0 : index
    %3 = vector.load %arg3[%c0_3, %c0_4] : memref<32x144xf32, #tpu.memory_space<vmem>>, vector<32x144xf32>
    %cst = arith.constant dense<0.000000e+00> : vector<16x144xf32>
    %4 = tpu.matmul %2, %3, %cst {dimension_numbers = #tpu.dot_dimension_numbers<[1], [0], [0], [1], [0, 0, 1, 1], [], []>} : vector<16x32xf32>, vector<32x144xf32>, vector<16x144xf32> -> vector<16x144xf32>
    %5 = tpu.iota {dimensions = array<i32: 1>} : vector<2x8x8xi32>
    %6 = tpu.iota {dimensions = array<i32: 2>} : vector<2x8x8xi32>
    %7 = arith.cmpi eq, %5, %6 : vector<2x8x8xi32>
    %cst_5 = arith.constant 0.000000e+00 : f32
    %8 = vector.broadcast %cst_5 : f32 to vector<16x128xf32>
    %9 = vector.extract_strided_slice %4 {offsets = [0, 0], sizes = [16, 16], strides = [1, 1]} : vector<16x144xf32> to vector<16x16xf32>
    %10 = vector.extract_strided_slice %4 {offsets = [0, 48], sizes = [16, 16], strides = [1, 1]} : vector<16x144xf32> to vector<16x16xf32>
    %11 = vector.extract_strided_slice %4 {offsets = [0, 96], sizes = [16, 16], strides = [1, 1]} : vector<16x144xf32> to vector<16x16xf32>
    %12 = vector.shape_cast %9 : vector<16x16xf32> to vector<2x8x16xf32>
    %13 = vector.shape_cast %10 : vector<16x16xf32> to vector<2x8x16xf32>
    %14 = vector.shape_cast %11 : vector<16x16xf32> to vector<2x8x16xf32>
    "tpu.trace_start"() <{level = 10 : i32, message = "bnd,bmd->bnm"}> : () -> ()
    %cst_6 = arith.constant dense<0.000000e+00> : vector<2x8x8xf32>
    %15 = tpu.matmul %12, %13, %cst_6 {dimension_numbers = #tpu.dot_dimension_numbers<[2], [2], [1], [1], [0, 0, 0, 1, 1, 1], [0], [0]>} : vector<2x8x16xf32>, vector<2x8x16xf32>, vector<2x8x8xf32> -> vector<2x8x8xf32>
    "tpu.trace_stop"() : () -> ()
    %16 = vector.broadcast %0 : f32 to vector<2x8x8xf32>
    %17 = arith.mulf %15, %16 : vector<2x8x8xf32>
    %cst_7 = arith.constant -3.40282347E+38 : f32
    %18 = vector.broadcast %cst_7 : f32 to vector<2x8x8xf32>
    %19 = arith.select %7, %18, %17 : vector<2x8x8xi1>, vector<2x8x8xf32>
    %cst_8 = arith.constant dense<0xFF800000> : vector<2x8xf32>
    %20 = vector.multi_reduction <maximumf>, %19, %cst_8 [2] : vector<2x8x8xf32> to vector<2x8xf32>
    %21 = vector.shape_cast %20 : vector<2x8xf32> to vector<2x8x1xf32>
    %22 = vector.broadcast %21 : vector<2x8x1xf32> to vector<2x8x8xf32>
    %23 = arith.subf %19, %22 : vector<2x8x8xf32>
    %24 = math.exp %23 : vector<2x8x8xf32>
    %cst_9 = arith.constant dense<0.000000e+00> : vector<2x8xf32>
    %25 = vector.multi_reduction <add>, %24, %cst_9 [2] : vector<2x8x8xf32> to vector<2x8xf32>
    %26 = vector.shape_cast %25 : vector<2x8xf32> to vector<2x8x1xf32>
    %27 = tpu.reciprocal %26 {approx = true} : vector<2x8x1xf32> -> vector<2x8x1xf32>
    %28 = vector.broadcast %27 : vector<2x8x1xf32> to vector<2x8x8xf32>
    %29 = arith.mulf %24, %28 : vector<2x8x8xf32>
    "tpu.trace_start"() <{level = 10 : i32, message = "bnm,bmd->bnd"}> : () -> ()
    %cst_10 = arith.constant dense<0.000000e+00> : vector<2x8x16xf32>
    %30 = tpu.matmul %29, %14, %cst_10 {dimension_numbers = #tpu.dot_dimension_numbers<[2], [1], [1], [2], [0, 0, 0, 1, 1, 2], [0], [0]>} : vector<2x8x8xf32>, vector<2x8x16xf32>, vector<2x8x16xf32> -> vector<2x8x16xf32>
    "tpu.trace_stop"() : () -> ()
    %31 = vector.shape_cast %30 : vector<2x8x16xf32> to vector<16x16xf32>
    %c0_11 = arith.constant 0 : index
    %c0_12 = arith.constant 0 : index
    %c0_13 = arith.constant 0 : index
    %32 = vector.load %arg4[%c0_11, %c0_12, %c0_13] : memref<3x16x128xf32, #tpu.memory_space<vmem>>, vector<1x16x128xf32>
    %33 = vector.shape_cast %32 : vector<1x16x128xf32> to vector<16x128xf32>
    %cst_14 = arith.constant dense<0.000000e+00> : vector<16x128xf32>
    %34 = tpu.matmul %31, %33, %cst_14 {dimension_numbers = #tpu.dot_dimension_numbers<[1], [0], [0], [1], [0, 0, 1, 1], [], []>} : vector<16x16xf32>, vector<16x128xf32>, vector<16x128xf32> -> vector<16x128xf32>
    %35 = arith.addf %8, %34 : vector<16x128xf32>
    %36 = vector.extract_strided_slice %4 {offsets = [0, 16], sizes = [16, 16], strides = [1, 1]} : vector<16x144xf32> to vector<16x16xf32>
    %37 = vector.extract_strided_slice %4 {offsets = [0, 64], sizes = [16, 16], strides = [1, 1]} : vector<16x144xf32> to vector<16x16xf32>
    %38 = vector.extract_strided_slice %4 {offsets = [0, 112], sizes = [16, 16], strides = [1, 1]} : vector<16x144xf32> to vector<16x16xf32>
    %39 = vector.shape_cast %36 : vector<16x16xf32> to vector<2x8x16xf32>
    %40 = vector.shape_cast %37 : vector<16x16xf32> to vector<2x8x16xf32>
    %41 = vector.shape_cast %38 : vector<16x16xf32> to vector<2x8x16xf32>
    "tpu.trace_start"() <{level = 10 : i32, message = "bnd,bmd->bnm"}> : () -> ()
    %cst_15 = arith.constant dense<0.000000e+00> : vector<2x8x8xf32>
    %42 = tpu.matmul %39, %40, %cst_15 {dimension_numbers = #tpu.dot_dimension_numbers<[2], [2], [1], [1], [0, 0, 0, 1, 1, 1], [0], [0]>} : vector<2x8x16xf32>, vector<2x8x16xf32>, vector<2x8x8xf32> -> vector<2x8x8xf32>
    "tpu.trace_stop"() : () -> ()
    %43 = vector.broadcast %0 : f32 to vector<2x8x8xf32>
    %44 = arith.mulf %42, %43 : vector<2x8x8xf32>
    %cst_16 = arith.constant -3.40282347E+38 : f32
    %45 = vector.broadcast %cst_16 : f32 to vector<2x8x8xf32>
    %46 = arith.select %7, %45, %44 : vector<2x8x8xi1>, vector<2x8x8xf32>
    %cst_17 = arith.constant dense<0xFF800000> : vector<2x8xf32>
    %47 = vector.multi_reduction <maximumf>, %46, %cst_17 [2] : vector<2x8x8xf32> to vector<2x8xf32>
    %48 = vector.shape_cast %47 : vector<2x8xf32> to vector<2x8x1xf32>
    %49 = vector.broadcast %48 : vector<2x8x1xf32> to vector<2x8x8xf32>
    %50 = arith.subf %46, %49 : vector<2x8x8xf32>
    %51 = math.exp %50 : vector<2x8x8xf32>
    %cst_18 = arith.constant dense<0.000000e+00> : vector<2x8xf32>
    %52 = vector.multi_reduction <add>, %51, %cst_18 [2] : vector<2x8x8xf32> to vector<2x8xf32>
    %53 = vector.shape_cast %52 : vector<2x8xf32> to vector<2x8x1xf32>
    %54 = tpu.reciprocal %53 {approx = true} : vector<2x8x1xf32> -> vector<2x8x1xf32>
    %55 = vector.broadcast %54 : vector<2x8x1xf32> to vector<2x8x8xf32>
    %56 = arith.mulf %51, %55 : vector<2x8x8xf32>
    "tpu.trace_start"() <{level = 10 : i32, message = "bnm,bmd->bnd"}> : () -> ()
    %cst_19 = arith.constant dense<0.000000e+00> : vector<2x8x16xf32>
    %57 = tpu.matmul %56, %41, %cst_19 {dimension_numbers = #tpu.dot_dimension_numbers<[2], [1], [1], [2], [0, 0, 0, 1, 1, 2], [0], [0]>} : vector<2x8x8xf32>, vector<2x8x16xf32>, vector<2x8x16xf32> -> vector<2x8x16xf32>
    "tpu.trace_stop"() : () -> ()
    %58 = vector.shape_cast %57 : vector<2x8x16xf32> to vector<16x16xf32>
    %c1 = arith.constant 1 : index
    %c0_20 = arith.constant 0 : index
    %c0_21 = arith.constant 0 : index
    %59 = vector.load %arg4[%c1, %c0_20, %c0_21] : memref<3x16x128xf32, #tpu.memory_space<vmem>>, vector<1x16x128xf32>
    %60 = vector.shape_cast %59 : vector<1x16x128xf32> to vector<16x128xf32>
    %cst_22 = arith.constant dense<0.000000e+00> : vector<16x128xf32>
    %61 = tpu.matmul %58, %60, %cst_22 {dimension_numbers = #tpu.dot_dimension_numbers<[1], [0], [0], [1], [0, 0, 1, 1], [], []>} : vector<16x16xf32>, vector<16x128xf32>, vector<16x128xf32> -> vector<16x128xf32>
    %62 = arith.addf %35, %61 : vector<16x128xf32>
    %63 = vector.extract_strided_slice %4 {offsets = [0, 32], sizes = [16, 16], strides = [1, 1]} : vector<16x144xf32> to vector<16x16xf32>
    %64 = vector.extract_strided_slice %4 {offsets = [0, 80], sizes = [16, 16], strides = [1, 1]} : vector<16x144xf32> to vector<16x16xf32>
    %65 = vector.extract_strided_slice %4 {offsets = [0, 128], sizes = [16, 16], strides = [1, 1]} : vector<16x144xf32> to vector<16x16xf32>
    %66 = vector.shape_cast %63 : vector<16x16xf32> to vector<2x8x16xf32>
    %67 = vector.shape_cast %64 : vector<16x16xf32> to vector<2x8x16xf32>
    %68 = vector.shape_cast %65 : vector<16x16xf32> to vector<2x8x16xf32>
    "tpu.trace_start"() <{level = 10 : i32, message = "bnd,bmd->bnm"}> : () -> ()
    %cst_23 = arith.constant dense<0.000000e+00> : vector<2x8x8xf32>
    %69 = tpu.matmul %66, %67, %cst_23 {dimension_numbers = #tpu.dot_dimension_numbers<[2], [2], [1], [1], [0, 0, 0, 1, 1, 1], [0], [0]>} : vector<2x8x16xf32>, vector<2x8x16xf32>, vector<2x8x8xf32> -> vector<2x8x8xf32>
    "tpu.trace_stop"() : () -> ()
    %70 = vector.broadcast %0 : f32 to vector<2x8x8xf32>
    %71 = arith.mulf %69, %70 : vector<2x8x8xf32>
    %cst_24 = arith.constant -3.40282347E+38 : f32
    %72 = vector.broadcast %cst_24 : f32 to vector<2x8x8xf32>
    %73 = arith.select %7, %72, %71 : vector<2x8x8xi1>, vector<2x8x8xf32>
    %cst_25 = arith.constant dense<0xFF800000> : vector<2x8xf32>
    %74 = vector.multi_reduction <maximumf>, %73, %cst_25 [2] : vector<2x8x8xf32> to vector<2x8xf32>
    %75 = vector.shape_cast %74 : vector<2x8xf32> to vector<2x8x1xf32>
    %76 = vector.broadcast %75 : vector<2x8x1xf32> to vector<2x8x8xf32>
    %77 = arith.subf %73, %76 : vector<2x8x8xf32>
    %78 = math.exp %77 : vector<2x8x8xf32>
    %cst_26 = arith.constant dense<0.000000e+00> : vector<2x8xf32>
    %79 = vector.multi_reduction <add>, %78, %cst_26 [2] : vector<2x8x8xf32> to vector<2x8xf32>
    %80 = vector.shape_cast %79 : vector<2x8xf32> to vector<2x8x1xf32>
    %81 = tpu.reciprocal %80 {approx = true} : vector<2x8x1xf32> -> vector<2x8x1xf32>
    %82 = vector.broadcast %81 : vector<2x8x1xf32> to vector<2x8x8xf32>
    %83 = arith.mulf %78, %82 : vector<2x8x8xf32>
    "tpu.trace_start"() <{level = 10 : i32, message = "bnm,bmd->bnd"}> : () -> ()
    %cst_27 = arith.constant dense<0.000000e+00> : vector<2x8x16xf32>
    %84 = tpu.matmul %83, %68, %cst_27 {dimension_numbers = #tpu.dot_dimension_numbers<[2], [1], [1], [2], [0, 0, 0, 1, 1, 2], [0], [0]>} : vector<2x8x8xf32>, vector<2x8x16xf32>, vector<2x8x16xf32> -> vector<2x8x16xf32>
    "tpu.trace_stop"() : () -> ()
    %85 = vector.shape_cast %84 : vector<2x8x16xf32> to vector<16x16xf32>
    %c2 = arith.constant 2 : index
    %c0_28 = arith.constant 0 : index
    %c0_29 = arith.constant 0 : index
    %86 = vector.load %arg4[%c2, %c0_28, %c0_29] : memref<3x16x128xf32, #tpu.memory_space<vmem>>, vector<1x16x128xf32>
    %87 = vector.shape_cast %86 : vector<1x16x128xf32> to vector<16x128xf32>
    %cst_30 = arith.constant dense<0.000000e+00> : vector<16x128xf32>
    %88 = tpu.matmul %85, %87, %cst_30 {dimension_numbers = #tpu.dot_dimension_numbers<[1], [0], [0], [1], [0, 0, 1, 1], [], []>} : vector<16x16xf32>, vector<16x128xf32>, vector<16x128xf32> -> vector<16x128xf32>
    %89 = arith.addf %62, %88 : vector<16x128xf32>
    %c0_31 = arith.constant 0 : index
    %c0_32 = arith.constant 0 : index
    %90 = vector.load %arg5[%c0_31, %c0_32] : memref<1x128xf32, #tpu.memory_space<vmem>>, vector<1x128xf32>
    %91 = vector.broadcast %90 : vector<1x128xf32> to vector<16x128xf32>
    %92 = arith.addf %89, %91 : vector<16x128xf32>
    %93 = vector.shape_cast %92 : vector<16x128xf32> to vector<2x8x128xf32>
    %c0_33 = arith.constant 0 : index
    %c0_34 = arith.constant 0 : index
    %c0_35 = arith.constant 0 : index
    %94 = vector.load %arg6[%c0_33, %c0_34, %c0_35] : memref<2x8x128xf32, #tpu.memory_space<vmem>>, vector<2x8x128xf32>
    tpu.vector_store %arg6[%c0_33, %c0_34, %c0_35], %93 {strides = array<i32>} : memref<2x8x128xf32, #tpu.memory_space<vmem>>, vector<2x8x128xf32>,
    return
  }
  func.func @transform_0(%arg0: i32) -> i32 {
    %c0_i32 = arith.constant 0 : i32
    %c0_i32_0 = arith.constant 0 : i32
    return %c0_i32 : i32
  }
  func.func @transform_1(%arg0: i32) -> (i32, i32, i32) {
    %c0_i32 = arith.constant 0 : i32
    %c0_i32_0 = arith.constant 0 : i32
    %c0_i32_1 = arith.constant 0 : i32
    return %arg0, %c0_i32, %c0_i32_0 : i32, i32, i32
  }
  func.func @transform_2(%arg0: i32) -> (i32, i32) {
    %c0_i32 = arith.constant 0 : i32
    %c0_i32_0 = arith.constant 0 : i32
    %c0_i32_1 = arith.constant 0 : i32
    return %c0_i32, %c0_i32_0 : i32, i32
  }
  func.func @transform_3(%arg0: i32) -> (i32, i32, i32) {
    %c0_i32 = arith.constant 0 : i32
    %c0_i32_0 = arith.constant 0 : i32
    %c0_i32_1 = arith.constant 0 : i32
    %c0_i32_2 = arith.constant 0 : i32
    return %c0_i32, %c0_i32_0, %c0_i32_1 : i32, i32, i32
  }
  func.func @transform_4(%arg0: i32) -> (i32, i32) {
    %c0_i32 = arith.constant 0 : i32
    %c0_i32_0 = arith.constant 0 : i32
    %c0_i32_1 = arith.constant 0 : i32
    return %c0_i32, %c0_i32_0 : i32, i32
  }
  func.func @transform_5(%arg0: i32) -> (i32, i32, i32) {
    %c0_i32 = arith.constant 0 : i32
    %c0_i32_0 = arith.constant 0 : i32
    %c0_i32_1 = arith.constant 0 : i32
    return %arg0, %c0_i32, %c0_i32_0 : i32, i32, i32
  }
}

</mosaic_0001>

<llo_original>
// kernel: lsa_forward.1
$region0: #{lsa_forward.1}
  #allocation0 [shape = 'u32[]', space=smem, size = 0x4, offset = 0x4, fixed_abs, tag = 'smem constant byte address 0x4 - core index']
  #allocation1 [shape = 'u32[72,128]{1,0:T(1,128)}', space=vmem, size = 0x9000, scoped, tag = 'internal scratch']
  #allocation2 [shape = 'f32[1]{0:T(128)S(6)}', space=smem, size = 0x200, scoped, tag = 'scoped memory for lsa_forward.1']
  %s0 = inlined_call_operand.<no memory space> [shape: f32[1], index: 0, kind: input, shape index: {}]
  %s1 = inlined_call_operand.hbm [shape: f32[2,8,32], index: 1, kind: input, shape index: {}]
  %s2 = inlined_call_operand.hbm [shape: f32[32,144], index: 2, kind: input, shape index: {}]
  %s3 = inlined_call_operand.hbm [shape: f32[3,16,128], index: 3, kind: input, shape index: {}]
  %s4 = inlined_call_operand.vmem [shape: f32[1,128], index: 4, kind: input, shape index: {}]
  %s5 = inlined_call_operand.hbm [shape: f32[2,8,128], index: 5, kind: output, shape index: {}]
  %s6 = sld [smem:[#allocation0]]
  $region42: #{lsa_forward.1} parent=0
    _
  %s8 = ssub.s32 1, %s6
  %s9 = scalar_select 0, %s8, %s6
  %10 = sst [smem:[#allocation2]] %s0
  $region1: #{lsa_forward.1} parent=0
    #allocation3 [shape = 'u8[8192]{0}', space=vmem, size = 0x2000, scoped, tag = 'input window, operand 1, single buffered']
    #allocation4 [shape = 's32[1]{0}', space=sflag, size = 0x4, scoped, tag = 'scoped memory for lsa_forward.1']
    #allocation5 [shape = 's32[1]{0}', space=sflag, size = 0x4, scoped, tag = 'scoped memory for lsa_forward.1']
    #allocation6 [shape = 'u8[32768]{0}', space=vmem, size = 0x8000, scoped, tag = 'input window, operand 2, single buffered']
    #allocation7 [shape = 's32[1]{0}', space=sflag, size = 0x4, scoped, tag = 'scoped memory for lsa_forward.1']
    #allocation8 [shape = 'u8[24576]{0}', space=vmem, size = 0x6000, scoped, tag = 'input window, operand 3, single buffered']
    #allocation9 [shape = 'u8[8192]{0}', space=vmem, size = 0x2000, scoped, tag = 'output window, operand 0, single buffered']
    %11 = vsyncpa [#allocation4], 0
    %12 = vsyncpa [#allocation7], 0
    %13 = vsyncpa [#allocation5], 0
    // Predicated region
    $region2: #{lsa_forward.1} parent=1 // pred_check
      _
    $region3: #{lsa_forward.1} parent=1 // pred_check_branch
      %15 = sbr.rel (0) target = $region5
    $region4: #{lsa_forward.1} parent=1 // pred_region
      _
    $region5: #{lsa_forward.1} parent=1 // pred_fallthru
      _
    // Predicated region
    $region6: #{lsa_forward.1} parent=1 // pred_check
      _
    $region7: #{lsa_forward.1} parent=1 // pred_check_branch
      %17 = sbr.rel (0) target = $region9
    $region8: #{lsa_forward.1} parent=1 // pred_region
      %19 = vsyncadd [#allocation4], 0
      %s20 = sshll.u32 %s1, 4
      %s21 = int_to_ptr.hbm [resolvable:$true] %s20
      %s22 = sshll.u32 [#allocation3], 4
      %s23 = int_to_ptr.vmem [resolvable:$true] %s22
      %28 = dma.hbm_to_vmem [thread:$0]  %s21, 256, %s23, [#allocation4], 128, 128, 8
    $region9: #{lsa_forward.1} parent=1 // pred_fallthru
      _
    // Predicated region
    $region10: #{lsa_forward.1} parent=1 // pred_check
      _
    $region11: #{lsa_forward.1} parent=1 // pred_check_branch
      %30 = sbr.rel (0) target = $region13
    $region12: #{lsa_forward.1} parent=1 // pred_region
      %32 = vsyncadd [#allocation7], 0
      %s33 = sshll.u32 %s2, 4
      %s34 = int_to_ptr.hbm [resolvable:$true] %s33
      %s35 = sshll.u32 [#allocation6], 4
      %s36 = int_to_ptr.vmem [resolvable:$true] %s35
      %41 = dma.hbm_to_vmem [thread:$0]  %s34, 1024, %s36, [#allocation7], 256, 256, 16
    $region13: #{lsa_forward.1} parent=1 // pred_fallthru
      _
    // Predicated region
    $region14: #{lsa_forward.1} parent=1 // pred_check
      _
    $region15: #{lsa_forward.1} parent=1 // pred_check_branch
      %43 = sbr.rel (0) target = $region17
    $region16: #{lsa_forward.1} parent=1 // pred_region
      %45 = vsyncadd [#allocation7], 0
      %s46 = sshll.u32 %s3, 4
      %s47 = int_to_ptr.hbm [resolvable:$true] %s46
      %s48 = sshll.u32 [#allocation8], 4
      %s49 = int_to_ptr.vmem [resolvable:$true] %s48
      %54 = dma.hbm_to_vmem [thread:$0]  %s47, 768, %s49, [#allocation7], 128, 128, 8
    $region17: #{lsa_forward.1} parent=1 // pred_fallthru
      _
    // Predicated region
    $region18: #{lsa_forward.1} parent=1 // pred_check
      _
    $region19: #{lsa_forward.1} parent=1 // pred_check_branch
      %56 = sbr.rel (0) target = $region21
    $region20: #{lsa_forward.1} parent=1 // pred_region
      _
    $region21: #{lsa_forward.1} parent=1 // pred_fallthru
      _
    // Predicated region
    $region22: #{lsa_forward.1} parent=1 // pred_check
      _
    $region23: #{lsa_forward.1} parent=1 // pred_check_branch
      %58 = sbr.rel (0) target = $region25
    $region24: #{lsa_forward.1} parent=1 // pred_region
      %60 = dma.done [#allocation4], 256
    $region25: #{lsa_forward.1} parent=1 // pred_fallthru
      _
    // Predicated region
    $region26: #{lsa_forward.1} parent=1 // pred_check
      _
    $region27: #{lsa_forward.1} parent=1 // pred_check_branch
      %62 = sbr.rel (0) target = $region29
    $region28: #{lsa_forward.1} parent=1 // pred_region
      %64 = dma.done [#allocation7], 1024
    $region29: #{lsa_forward.1} parent=1 // pred_fallthru
      _
    // Predicated region
    $region30: #{lsa_forward.1} parent=1 // pred_check
      _
    $region31: #{lsa_forward.1} parent=1 // pred_check_branch
      %66 = sbr.rel (0) target = $region33
    $region32: #{lsa_forward.1} parent=1 // pred_region
      %68 = dma.done [#allocation7], 768
    $region33: #{lsa_forward.1} parent=1 // pred_fallthru
      _
    %s69 = sld [smem:[#allocation2]]
    %v70 = vld [vmem:[#allocation3] sm:$0xff]
    %v71 = vld [vmem:[#allocation3 + $0x8] sm:$0xff]
    %v72 = vld [vmem:[#allocation6] sm:$0xff]
    %v73 = vld [vmem:[#allocation6 + $0x8] sm:$0xff]
    %v74 = vld [vmem:[#allocation6 + $0x10] sm:$0xff]
    %v75 = vld [vmem:[#allocation6 + $0x18] sm:$0xff]
    %v76 = vld [vmem:[#allocation6 + $0x20] sm:$0xff]
    %v77 = vld [vmem:[#allocation6 + $0x28] sm:$0xff]
    %v78 = vld [vmem:[#allocation6 + $0x30] sm:$0xff]
    %v79 = vld [vmem:[#allocation6 + $0x38] sm:$0xff]
    %vm80 = vcmask 261120
    %v82 = vsel %vm80, %v70, 0
    %v85 = vsel %vm80, %v71, 0
    %87 = vmatpush.msra.mxu0 0.0
    %88 = vmatpush.msra.mxu0 0.0
    %89 = vmatpush.msra.mxu0 0.0
    %90 = vmatpush.msra.mxu0 0.0
    %91 = vmatpush.msra.mxu0 0.0
    %92 = vmatpush.msra.mxu0 0.0
    %93 = vmatpush.msra.mxu0 0.0
    %94 = vmatpush.msra.mxu0 0.0
    %95 = vmatpush.msra.mxu0 0.0
    %96 = vmatpush.msra.mxu0 0.0
    %97 = vmatpush.msra.mxu0 0.0
    %98 = vmatpush.msra.mxu0 0.0
    %99 = vmatpush.msra.mxu0 %v78
    %100 = vmatpush.msra.mxu0 %v76
    %101 = vmatpush.msra.mxu0 %v74
    %102 = vmatpush.msra.mxu0 %v72
    %103 = vmatmul.f32.gmra.mxu0 %v82
    %v104 = vpop.f32.mrf.mxu0
    %v105 = vadd.f32 0.0, %v104
    %106 = vmatmul.f32.gmra.mxu0 %v85
    %v107 = vpop.f32.mrf.mxu0
    %v108 = vadd.f32 0.0, %v107
    %109 = vdwg.mxu0
    %110 = vmatpush.msra.mxu0 0.0
    %111 = vmatpush.msra.mxu0 0.0
    %112 = vmatpush.msra.mxu0 0.0
    %113 = vmatpush.msra.mxu0 0.0
    %114 = vmatpush.msra.mxu0 0.0
    %115 = vmatpush.msra.mxu0 0.0
    %116 = vmatpush.msra.mxu0 0.0
    %117 = vmatpush.msra.mxu0 0.0
    %118 = vmatpush.msra.mxu0 0.0
    %119 = vmatpush.msra.mxu0 0.0
    %120 = vmatpush.msra.mxu0 0.0
    %121 = vmatpush.msra.mxu0 0.0
    %122 = vmatpush.msra.mxu0 %v79
    %123 = vmatpush.msra.mxu0 %v77
    %124 = vmatpush.msra.mxu0 %v75
    %125 = vmatpush.msra.mxu0 %v73
    %126 = vmatmul.f32.gmra.mxu0 %v82
    %v127 = vpop.f32.mrf.mxu0
    %v128 = vadd.f32 0.0, %v127
    %129 = vmatmul.f32.gmra.mxu0 %v85
    %v130 = vpop.f32.mrf.mxu0
    %v131 = vadd.f32 0.0, %v130
    %132 = vdwg.mxu0
    %v133 = vlaneseq
    %v134 = vshrl.u32 %v133, 7
    %v135 = vlaneseq
    %v136 = vand.u32 %v135, 127
    %vm137 = vcmp.eq.s32.totalorder %v134, %v136
    %139 = vrot.lane.b32.xlu0 %v105, 80
    %v140 = vpop.permute.xlu0 %139
    %vm141 = vcmask 130048
    %v142 = vsel %vm141, %v105, 0
    %v144 = vsel %vm141, %v140, 0
    %146 = vmatpush.xpose.msra.mxu0 0.0
    %147 = vmatpush.xpose.msra.mxu0 0.0
    %148 = vmatpush.xpose.msra.mxu0 0.0
    %149 = vmatpush.xpose.msra.mxu0 0.0
    %150 = vmatpush.xpose.msra.mxu0 0.0
    %151 = vmatpush.xpose.msra.mxu0 0.0
    %152 = vmatpush.xpose.msra.mxu0 0.0
    %153 = vmatpush.xpose.msra.mxu0 0.0
    %154 = vmatpush.xpose.msra.mxu0 0.0
    %155 = vmatpush.xpose.msra.mxu0 0.0
    %156 = vmatpush.xpose.msra.mxu0 0.0
    %157 = vmatpush.xpose.msra.mxu0 0.0
    %158 = vmatpush.xpose.msra.mxu0 0.0
    %159 = vmatpush.xpose.msra.mxu0 0.0
    %160 = vmatpush.xpose.msra.mxu0 0.0
    %161 = vmatpush.xpose.msra.mxu0 %v144
    %162 = vmatmul.f32.gmra.mxu0 %v142
    %v163 = vpop.f32.mrf.mxu0
    %v164 = vadd.f32 0.0, %v163
    %165 = vdwg.mxu0
    %167 = vrot.lane.b32.xlu0 %v108, 80
    %v168 = vpop.permute.xlu0 %167
    %v169 = vsel %vm141, %v108, 0
    %v171 = vsel %vm141, %v168, 0
    %173 = vmatpush.xpose.msra.mxu0 0.0
    %174 = vmatpush.xpose.msra.mxu0 0.0
    %175 = vmatpush.xpose.msra.mxu0 0.0
    %176 = vmatpush.xpose.msra.mxu0 0.0
    %177 = vmatpush.xpose.msra.mxu0 0.0
    %178 = vmatpush.xpose.msra.mxu0 0.0
    %179 = vmatpush.xpose.msra.mxu0 0.0
    %180 = vmatpush.xpose.msra.mxu0 0.0
    %181 = vmatpush.xpose.msra.mxu0 0.0
    %182 = vmatpush.xpose.msra.mxu0 0.0
    %183 = vmatpush.xpose.msra.mxu0 0.0
    %184 = vmatpush.xpose.msra.mxu0 0.0
    %185 = vmatpush.xpose.msra.mxu0 0.0
    %186 = vmatpush.xpose.msra.mxu0 0.0
    %187 = vmatpush.xpose.msra.mxu0 0.0
    %188 = vmatpush.xpose.msra.mxu0 %v171
    %189 = vmatmul.f32.gmra.mxu0 %v169
    %v190 = vpop.f32.mrf.mxu0
    %v191 = vadd.f32 0.0, %v190
    %192 = vdwg.mxu0
    %v193 = vstv %s69
    %v194 = vmul.f32 %v164, %v193
    %v195 = vmul.f32 %v191, %v193
    %v196 = vsel %vm137, -3.4028235e+38, %v194
    %v197 = vsel %vm137, -3.4028235e+38, %v195
    %vm198 = vcmask 64512
    %v199 = vsel %vm198, %v196, -inf
    %200 = vmax.xlane.f32.xlu0 %v199
    %v201 = vpop.xlane.xlu0 %200
    %v202 = vsel %vm198, %v197, -inf
    %203 = vmax.xlane.f32.xlu0 %v202
    %v204 = vpop.xlane.xlu0 %203
    %v205 = vsub.f32 %v196, %v201
    %v206 = vsub.f32 %v197, %v204
    %v207 = vmul.f32 %v205, 1.442695
    %v208 = vpow.pop %v207
    %v209 = vmul.f32 %v206, 1.442695
    %v210 = vpow.pop %v209
    %v211 = vsel %vm198, %v208, 0.0
    %212 = vadd.xlane.f32.xlu0 %v211
    %v213 = vpop.xlane.xlu0 %212
    %v214 = vsel %vm198, %v210, 0.0
    %215 = vadd.xlane.f32.xlu0 %v214
    %v216 = vpop.xlane.xlu0 %215
    %v217 = vrcp.pop %v213
    %v218 = vrcp.pop %v216
    %v219 = vmul.f32 %v208, %v217
    %v220 = vmul.f32 %v210, %v218
    %221 = vrot.lane.b32.xlu0 %v105, 32
    %v222 = vpop.permute.xlu0 %221
    %v225 = vsel %vm198, %v219, 0
    %227 = vmatpush.msra.mxu0 0.0
    %228 = vmatpush.msra.mxu0 0.0
    %229 = vmatpush.msra.mxu0 0.0
    %230 = vmatpush.msra.mxu0 0.0
    %231 = vmatpush.msra.mxu0 0.0
    %232 = vmatpush.msra.mxu0 0.0
    %233 = vmatpush.msra.mxu0 0.0
    %234 = vmatpush.msra.mxu0 0.0
    %235 = vmatpush.msra.mxu0 0.0
    %236 = vmatpush.msra.mxu0 0.0
    %237 = vmatpush.msra.mxu0 0.0
    %238 = vmatpush.msra.mxu0 0.0
    %239 = vmatpush.msra.mxu0 0.0
    %240 = vmatpush.msra.mxu0 0.0
    %241 = vmatpush.msra.mxu0 0.0
    %242 = vmatpush.msra.mxu0 %v222
    %243 = vmatmul.f32.gmra.mxu0 %v225
    %v244 = vpop.f32.mrf.mxu0
    %v245 = vadd.f32 0.0, %v244
    %246 = vdwg.mxu0
    %247 = vrot.lane.b32.xlu0 %v108, 32
    %v248 = vpop.permute.xlu0 %247
    %v251 = vsel %vm198, %v220, 0
    %253 = vmatpush.msra.mxu0 0.0
    %254 = vmatpush.msra.mxu0 0.0
    %255 = vmatpush.msra.mxu0 0.0
    %256 = vmatpush.msra.mxu0 0.0
    %257 = vmatpush.msra.mxu0 0.0
    %258 = vmatpush.msra.mxu0 0.0
    %259 = vmatpush.msra.mxu0 0.0
    %260 = vmatpush.msra.mxu0 0.0
    %261 = vmatpush.msra.mxu0 0.0
    %262 = vmatpush.msra.mxu0 0.0
    %263 = vmatpush.msra.mxu0 0.0
    %264 = vmatpush.msra.mxu0 0.0
    %265 = vmatpush.msra.mxu0 0.0
    %266 = vmatpush.msra.mxu0 0.0
    %267 = vmatpush.msra.mxu0 0.0
    %268 = vmatpush.msra.mxu0 %v248
    %269 = vmatmul.f32.gmra.mxu0 %v251
    %v270 = vpop.f32.mrf.mxu0
    %v271 = vadd.f32 0.0, %v270
    %272 = vdwg.mxu0
    %v273 = vld [vmem:[#allocation8] sm:$0xff]
    %v274 = vld [vmem:[#allocation8 + $0x8] sm:$0xff]
    %275 = vrot.lane.b32.xlu0 %v105, 112
    %v276 = vpop.permute.xlu0 %275
    %277 = vrot.lane.b32.xlu0 %v105, 64
    %v278 = vpop.permute.xlu0 %277
    %v279 = vsel %vm141, %v276, 0
    %v281 = vsel %vm141, %v278, 0
    %283 = vmatpush.xpose.msra.mxu0 0.0
    %284 = vmatpush.xpose.msra.mxu0 0.0
    %285 = vmatpush.xpose.msra.mxu0 0.0
    %286 = vmatpush.xpose.msra.mxu0 0.0
    %287 = vmatpush.xpose.msra.mxu0 0.0
    %288 = vmatpush.xpose.msra.mxu0 0.0
    %289 = vmatpush.xpose.msra.mxu0 0.0
    %290 = vmatpush.xpose.msra.mxu0 0.0
    %291 = vmatpush.xpose.msra.mxu0 0.0
    %292 = vmatpush.xpose.msra.mxu0 0.0
    %293 = vmatpush.xpose.msra.mxu0 0.0
    %294 = vmatpush.xpose.msra.mxu0 0.0
    %295 = vmatpush.xpose.msra.mxu0 0.0
    %296 = vmatpush.xpose.msra.mxu0 0.0
    %297 = vmatpush.xpose.msra.mxu0 0.0
    %298 = vmatpush.xpose.msra.mxu0 %v281
    %299 = vmatmul.f32.gmra.mxu0 %v279
    %v300 = vpop.f32.mrf.mxu0
    %v301 = vadd.f32 0.0, %v300
    %302 = vdwg.mxu0
    %303 = vrot.lane.b32.xlu0 %v108, 112
    %v304 = vpop.permute.xlu0 %303
    %305 = vrot.lane.b32.xlu0 %v108, 64
    %v306 = vpop.permute.xlu0 %305
    %v307 = vsel %vm141, %v304, 0
    %v309 = vsel %vm141, %v306, 0
    %311 = vmatpush.xpose.msra.mxu0 0.0
    %312 = vmatpush.xpose.msra.mxu0 0.0
    %313 = vmatpush.xpose.msra.mxu0 0.0
    %314 = vmatpush.xpose.msra.mxu0 0.0
    %315 = vmatpush.xpose.msra.mxu0 0.0
    %316 = vmatpush.xpose.msra.mxu0 0.0
    %317 = vmatpush.xpose.msra.mxu0 0.0
    %318 = vmatpush.xpose.msra.mxu0 0.0
    %319 = vmatpush.xpose.msra.mxu0 0.0
    %320 = vmatpush.xpose.msra.mxu0 0.0
    %321 = vmatpush.xpose.msra.mxu0 0.0
    %322 = vmatpush.xpose.msra.mxu0 0.0
    %323 = vmatpush.xpose.msra.mxu0 0.0
    %324 = vmatpush.xpose.msra.mxu0 0.0
    %325 = vmatpush.xpose.msra.mxu0 0.0
    %326 = vmatpush.xpose.msra.mxu0 %v309
    %327 = vmatmul.f32.gmra.mxu0 %v307
    %v328 = vpop.f32.mrf.mxu0
    %v329 = vadd.f32 0.0, %v328
    %330 = vdwg.mxu0
    %v331 = vmul.f32 %v301, %v193
    %v332 = vmul.f32 %v329, %v193
    %v333 = vsel %vm137, -3.4028235e+38, %v331
    %v334 = vsel %vm137, -3.4028235e+38, %v332
    %v335 = vsel %vm198, %v333, -inf
    %336 = vmax.xlane.f32.xlu0 %v335
    %v337 = vpop.xlane.xlu0 %336
    %v338 = vsel %vm198, %v334, -inf
    %339 = vmax.xlane.f32.xlu0 %v338
    %v340 = vpop.xlane.xlu0 %339
    %v341 = vsub.f32 %v333, %v337
    %v342 = vsub.f32 %v334, %v340
    %v343 = vmul.f32 %v341, 1.442695
    %v344 = vpow.pop %v343
    %v345 = vmul.f32 %v342, 1.442695
    %v346 = vpow.pop %v345
    %v347 = vsel %vm198, %v344, 0.0
    %348 = vadd.xlane.f32.xlu0 %v347
    %v349 = vpop.xlane.xlu0 %348
    %v350 = vsel %vm198, %v346, 0.0
    %351 = vadd.xlane.f32.xlu0 %v350
    %v352 = vpop.xlane.xlu0 %351
    %v353 = vrcp.pop %v349
    %v354 = vrcp.pop %v352
    %v355 = vmul.f32 %v344, %v353
    %v356 = vmul.f32 %v346, %v354
    %357 = vrot.lane.b32.xlu0 %v105, 16
    %v358 = vpop.permute.xlu0 %357
    %v361 = vsel %vm198, %v355, 0
    %363 = vmatpush.msra.mxu0 0.0
    %364 = vmatpush.msra.mxu0 0.0
    %365 = vmatpush.msra.mxu0 0.0
    %366 = vmatpush.msra.mxu0 0.0
    %367 = vmatpush.msra.mxu0 0.0
    %368 = vmatpush.msra.mxu0 0.0
    %369 = vmatpush.msra.mxu0 0.0
    %370 = vmatpush.msra.mxu0 0.0
    %371 = vmatpush.msra.mxu0 0.0
    %372 = vmatpush.msra.mxu0 0.0
    %373 = vmatpush.msra.mxu0 0.0
    %374 = vmatpush.msra.mxu0 0.0
    %375 = vmatpush.msra.mxu0 0.0
    %376 = vmatpush.msra.mxu0 0.0
    %377 = vmatpush.msra.mxu0 0.0
    %378 = vmatpush.msra.mxu0 %v358
    %379 = vmatmul.f32.gmra.mxu0 %v361
    %v380 = vpop.f32.mrf.mxu0
    %v381 = vadd.f32 0.0, %v380
    %382 = vdwg.mxu0
    %383 = vrot.lane.b32.xlu0 %v108, 16
    %v384 = vpop.permute.xlu0 %383
    %v387 = vsel %vm198, %v356, 0
    %389 = vmatpush.msra.mxu0 0.0
    %390 = vmatpush.msra.mxu0 0.0
    %391 = vmatpush.msra.mxu0 0.0
    %392 = vmatpush.msra.mxu0 0.0
    %393 = vmatpush.msra.mxu0 0.0
    %394 = vmatpush.msra.mxu0 0.0
    %395 = vmatpush.msra.mxu0 0.0
    %396 = vmatpush.msra.mxu0 0.0
    %397 = vmatpush.msra.mxu0 0.0
    %398 = vmatpush.msra.mxu0 0.0
    %399 = vmatpush.msra.mxu0 0.0
    %400 = vmatpush.msra.mxu0 0.0
    %401 = vmatpush.msra.mxu0 0.0
    %402 = vmatpush.msra.mxu0 0.0
    %403 = vmatpush.msra.mxu0 0.0
    %404 = vmatpush.msra.mxu0 %v384
    %405 = vmatmul.f32.gmra.mxu0 %v387
    %v406 = vpop.f32.mrf.mxu0
    %v407 = vadd.f32 0.0, %v406
    %408 = vdwg.mxu0
    %s409 = scalar_lea.vmem [#allocation8], 16
    %v410 = vld [vmem:[%s409] sm:$0xff]
    %v411 = vld [vmem:[%s409 + $0x8] sm:$0xff]
    %v413 = vsel %vm141, %v381, 0
    %v416 = vsel %vm141, %v407, 0
    %418 = vmatpush.msra.mxu0 0.0
    %419 = vmatpush.msra.mxu0 0.0
    %420 = vmatpush.msra.mxu0 0.0
    %421 = vmatpush.msra.mxu0 0.0
    %422 = vmatpush.msra.mxu0 0.0
    %423 = vmatpush.msra.mxu0 0.0
    %424 = vmatpush.msra.mxu0 0.0
    %425 = vmatpush.msra.mxu0 0.0
    %426 = vmatpush.msra.mxu0 0.0
    %427 = vmatpush.msra.mxu0 0.0
    %428 = vmatpush.msra.mxu0 0.0
    %429 = vmatpush.msra.mxu0 0.0
    %430 = vmatpush.msra.mxu0 0.0
    %431 = vmatpush.msra.mxu0 0.0
    %432 = vmatpush.msra.mxu0 %v411
    %433 = vmatpush.msra.mxu0 %v410
    %434 = vmatmul.f32.gmra.mxu0 %v413
    %v435 = vpop.f32.mrf.mxu0
    %v436 = vadd.f32 0.0, %v435
    %437 = vmatmul.f32.gmra.mxu0 %v416
    %v438 = vpop.f32.mrf.mxu0
    %v439 = vadd.f32 0.0, %v438
    %440 = vdwg.mxu0
    %v442 = vsel %vm141, %v245, 0
    %v445 = vsel %vm141, %v271, 0
    %447 = vmatpush.msra.mxu0 0.0
    %448 = vmatpush.msra.mxu0 0.0
    %449 = vmatpush.msra.mxu0 0.0
    %450 = vmatpush.msra.mxu0 0.0
    %451 = vmatpush.msra.mxu0 0.0
    %452 = vmatpush.msra.mxu0 0.0
    %453 = vmatpush.msra.mxu0 0.0
    %454 = vmatpush.msra.mxu0 0.0
    %455 = vmatpush.msra.mxu0 0.0
    %456 = vmatpush.msra.mxu0 0.0
    %457 = vmatpush.msra.mxu0 0.0
    %458 = vmatpush.msra.mxu0 0.0
    %459 = vmatpush.msra.mxu0 0.0
    %460 = vmatpush.msra.mxu0 0.0
    %461 = vmatpush.msra.mxu0 %v274
    %462 = vmatpush.msra.mxu0 %v273
    %463 = vmatmul.f32.gmra.mxu0 %v442
    %v464 = vpop.f32.mrf.mxu0
    %v465 = vadd.f32 %v436, %v464
    %466 = vmatmul.f32.gmra.mxu0 %v445
    %v467 = vpop.f32.mrf.mxu0
    %v468 = vadd.f32 %v439, %v467
    %469 = vdwg.mxu0
    %470 = vrot.lane.b32.xlu0 %v105, 96
    %v471 = vpop.permute.xlu0 %470
    %472 = vrot.lane.b32.xlu0 %v105, 48
    %v473 = vpop.permute.xlu0 %472
    %v474 = vsel %vm141, %v471, 0
    %v476 = vsel %vm141, %v473, 0
    %478 = vmatpush.xpose.msra.mxu0 0.0
    %479 = vmatpush.xpose.msra.mxu0 0.0
    %480 = vmatpush.xpose.msra.mxu0 0.0
    %481 = vmatpush.xpose.msra.mxu0 0.0
    %482 = vmatpush.xpose.msra.mxu0 0.0
    %483 = vmatpush.xpose.msra.mxu0 0.0
    %484 = vmatpush.xpose.msra.mxu0 0.0
    %485 = vmatpush.xpose.msra.mxu0 0.0
    %486 = vmatpush.xpose.msra.mxu0 0.0
    %487 = vmatpush.xpose.msra.mxu0 0.0
    %488 = vmatpush.xpose.msra.mxu0 0.0
    %489 = vmatpush.xpose.msra.mxu0 0.0
    %490 = vmatpush.xpose.msra.mxu0 0.0
    %491 = vmatpush.xpose.msra.mxu0 0.0
    %492 = vmatpush.xpose.msra.mxu0 0.0
    %493 = vmatpush.xpose.msra.mxu0 %v476
    %494 = vmatmul.f32.gmra.mxu0 %v474
    %v495 = vpop.f32.mrf.mxu0
    %v496 = vadd.f32 0.0, %v495
    %497 = vdwg.mxu0
    %498 = vrot.lane.b32.xlu0 %v108, 96
    %v499 = vpop.permute.xlu0 %498
    %500 = vrot.lane.b32.xlu0 %v108, 48
    %v501 = vpop.permute.xlu0 %500
    %v502 = vsel %vm141, %v499, 0
    %v504 = vsel %vm141, %v501, 0
    %506 = vmatpush.xpose.msra.mxu0 0.0
    %507 = vmatpush.xpose.msra.mxu0 0.0
    %508 = vmatpush.xpose.msra.mxu0 0.0
    %509 = vmatpush.xpose.msra.mxu0 0.0
    %510 = vmatpush.xpose.msra.mxu0 0.0
    %511 = vmatpush.xpose.msra.mxu0 0.0
    %512 = vmatpush.xpose.msra.mxu0 0.0
    %513 = vmatpush.xpose.msra.mxu0 0.0
    %514 = vmatpush.xpose.msra.mxu0 0.0
    %515 = vmatpush.xpose.msra.mxu0 0.0
    %516 = vmatpush.xpose.msra.mxu0 0.0
    %517 = vmatpush.xpose.msra.mxu0 0.0
    %518 = vmatpush.xpose.msra.mxu0 0.0
    %519 = vmatpush.xpose.msra.mxu0 0.0
    %520 = vmatpush.xpose.msra.mxu0 0.0
    %521 = vmatpush.xpose.msra.mxu0 %v504
    %522 = vmatmul.f32.gmra.mxu0 %v502
    %v523 = vpop.f32.mrf.mxu0
    %v524 = vadd.f32 0.0, %v523
    %525 = vdwg.mxu0
    %v526 = vmul.f32 %v496, %v193
    %v527 = vmul.f32 %v524, %v193
    %v528 = vsel %vm137, -3.4028235e+38, %v526
    %v529 = vsel %vm137, -3.4028235e+38, %v527
    %v530 = vsel %vm198, %v528, -inf
    %531 = vmax.xlane.f32.xlu0 %v530
    %v532 = vpop.xlane.xlu0 %531
    %v533 = vsel %vm198, %v529, -inf
    %534 = vmax.xlane.f32.xlu0 %v533
    %v535 = vpop.xlane.xlu0 %534
    %v536 = vsub.f32 %v528, %v532
    %v537 = vsub.f32 %v529, %v535
    %v538 = vmul.f32 %v536, 1.442695
    %v539 = vpow.pop %v538
    %v540 = vmul.f32 %v537, 1.442695
    %v541 = vpow.pop %v540
    %v542 = vsel %vm198, %v539, 0.0
    %543 = vadd.xlane.f32.xlu0 %v542
    %v544 = vpop.xlane.xlu0 %543
    %v545 = vsel %vm198, %v541, 0.0
    %546 = vadd.xlane.f32.xlu0 %v545
    %v547 = vpop.xlane.xlu0 %546
    %v548 = vrcp.pop %v544
    %v549 = vrcp.pop %v547
    %v550 = vmul.f32 %v539, %v548
    %v551 = vmul.f32 %v541, %v549
    %v553 = vsel %vm198, %v550, 0
    %555 = vmatpush.msra.mxu0 0.0
    %556 = vmatpush.msra.mxu0 0.0
    %557 = vmatpush.msra.mxu0 0.0
    %558 = vmatpush.msra.mxu0 0.0
    %559 = vmatpush.msra.mxu0 0.0
    %560 = vmatpush.msra.mxu0 0.0
    %561 = vmatpush.msra.mxu0 0.0
    %562 = vmatpush.msra.mxu0 0.0
    %563 = vmatpush.msra.mxu0 0.0
    %564 = vmatpush.msra.mxu0 0.0
    %565 = vmatpush.msra.mxu0 0.0
    %566 = vmatpush.msra.mxu0 0.0
    %567 = vmatpush.msra.mxu0 0.0
    %568 = vmatpush.msra.mxu0 0.0
    %569 = vmatpush.msra.mxu0 0.0
    %570 = vmatpush.msra.mxu0 %v128
    %571 = vmatmul.f32.gmra.mxu0 %v553
    %v572 = vpop.f32.mrf.mxu0
    %v573 = vadd.f32 0.0, %v572
    %574 = vdwg.mxu0
    %v576 = vsel %vm198, %v551, 0
    %578 = vmatpush.msra.mxu0 0.0
    %579 = vmatpush.msra.mxu0 0.0
    %580 = vmatpush.msra.mxu0 0.0
    %581 = vmatpush.msra.mxu0 0.0
    %582 = vmatpush.msra.mxu0 0.0
    %583 = vmatpush.msra.mxu0 0.0
    %584 = vmatpush.msra.mxu0 0.0
    %585 = vmatpush.msra.mxu0 0.0
    %586 = vmatpush.msra.mxu0 0.0
    %587 = vmatpush.msra.mxu0 0.0
    %588 = vmatpush.msra.mxu0 0.0
    %589 = vmatpush.msra.mxu0 0.0
    %590 = vmatpush.msra.mxu0 0.0
    %591 = vmatpush.msra.mxu0 0.0
    %592 = vmatpush.msra.mxu0 0.0
    %593 = vmatpush.msra.mxu0 %v131
    %594 = vmatmul.f32.gmra.mxu0 %v576
    %v595 = vpop.f32.mrf.mxu0
    %v596 = vadd.f32 0.0, %v595
    %597 = vdwg.mxu0
    %s598 = scalar_lea.vmem [#allocation8], 32
    %v599 = vld [vmem:[%s598] sm:$0xff]
    %v600 = vld [vmem:[%s598 + $0x8] sm:$0xff]
    %v602 = vsel %vm141, %v573, 0
    %v605 = vsel %vm141, %v596, 0
    %607 = vmatpush.msra.mxu0 0.0
    %608 = vmatpush.msra.mxu0 0.0
    %609 = vmatpush.msra.mxu0 0.0
    %610 = vmatpush.msra.mxu0 0.0
    %611 = vmatpush.msra.mxu0 0.0
    %612 = vmatpush.msra.mxu0 0.0
    %613 = vmatpush.msra.mxu0 0.0
    %614 = vmatpush.msra.mxu0 0.0
    %615 = vmatpush.msra.mxu0 0.0
    %616 = vmatpush.msra.mxu0 0.0
    %617 = vmatpush.msra.mxu0 0.0
    %618 = vmatpush.msra.mxu0 0.0
    %619 = vmatpush.msra.mxu0 0.0
    %620 = vmatpush.msra.mxu0 0.0
    %621 = vmatpush.msra.mxu0 %v600
    %622 = vmatpush.msra.mxu0 %v599
    %623 = vmatmul.f32.gmra.mxu0 %v602
    %v624 = vpop.f32.mrf.mxu0
    %v625 = vadd.f32 0.0, %v624
    %626 = vmatmul.f32.gmra.mxu0 %v605
    %v627 = vpop.f32.mrf.mxu0
    %v628 = vadd.f32 0.0, %v627
    %629 = vdwg.mxu0
    %v630 = vadd.f32 %v465, %v625
    %v631 = vadd.f32 %v468, %v628
    %v632 = vld [vmem:[%s4] sm:$0x1]
    %v634 = vperm.slane %v632, 0
    %v636 = vadd.f32 %v630, %v634
    %v637 = vadd.f32 %v631, %v634
    %638 = vst [vmem:[#allocation9] sm:$0xff] %v636
    %639 = vst [vmem:[#allocation9 + $0x8] sm:$0xff] %v637
    // Predicated region
    $region34: #{lsa_forward.1} parent=1 // pred_check
      _
    $region35: #{lsa_forward.1} parent=1 // pred_check_branch
      %641 = sbr.rel (0) target = $region37
    $region36: #{lsa_forward.1} parent=1 // pred_region
      %643 = vsyncadd [#allocation5], 0
      %s644 = sshll.u32 [#allocation9], 4
      %s645 = int_to_ptr.vmem [resolvable:$true] %s644
      %s646 = sshll.u32 %s5, 4
      %s647 = int_to_ptr.hbm [resolvable:$true] %s646
      %652 = dma.vmem_to_hbm [thread:$0]  %s645, 256, %s647, [#allocation5], 128, 128, 8
    $region37: #{lsa_forward.1} parent=1 // pred_fallthru
      _
    // Predicated region
    $region38: #{lsa_forward.1} parent=1 // pred_check
      _
    $region39: #{lsa_forward.1} parent=1 // pred_check_branch
      %654 = sbr.rel (0) target = $region41
    $region40: #{lsa_forward.1} parent=1 // pred_region
      %656 = dma.done [#allocation5], 256
    $region41: #{lsa_forward.1} parent=1 // pred_fallthru
      _
    %657 = vsyncpa [#allocation4], 1
    %658 = vsyncpa [#allocation7], 1
    %659 = vsyncpa [#allocation5], 1

</llo_original>
